<compile_context>
chip_gen: v6e
topology: v6e:2x2x1
jax: 0.10.0
libtpu: 0.0.40
codegen_flags: <defaults>
</compile_context>

<pallas_src>
import functools

import jax
import jax.numpy as jnp
from jax.experimental import pallas as pl
from jax.experimental.pallas import tpu as pltpu

LANE = 128
_VMEM_LIMIT = 64 * 1024 * 1024


# ---------------------------------------------------------------------------
# helpers
# ---------------------------------------------------------------------------

def _round_up(x, m):
    return ((x + m - 1) // m) * m


def _pick_tile(dim):
    # dims are padded to multiples of 128, so 128 always divides.
    for t in (512, 256, 128):
        if dim % t == 0:
            return t
    return dim


def _pad2(a, rows, cols):
    return jnp.pad(a, ((0, rows - a.shape[0]), (0, cols - a.shape[1])))


def _itemsize(dt):
    return 2 if dt == jnp.bfloat16 else 4


# ---------------------------------------------------------------------------
# Pallas kernels
# ---------------------------------------------------------------------------

def _inv_degree_kernel(adj_ref, out_ref, acc_ref):
    """inv_deg = 1 / (rowsum(adj) + 1); grid = (row blocks, col blocks)."""
    k = pl.program_id(1)

    @pl.when(k == 0)
    def _():
        acc_ref[...] = jnp.zeros_like(acc_ref)

    acc_ref[...] += jnp.sum(adj_ref[...].astype(jnp.float32), axis=1,
                            keepdims=True)

    @pl.when(k == pl.num_programs(1) - 1)
    def _():
        out_ref[...] = 1.0 / (acc_ref[...] + 1.0)


def _matmul_kernel(a_ref, b_ref, o_ref, acc_ref):
    """Generic tiled matmul with f32 VMEM accumulator (support = x @ W)."""
    @pl.when(pl.program_id(2) == 0)
    def _():
        acc_ref[...] = jnp.zeros_like(acc_ref)

    acc_ref[...] += jnp.dot(a_ref[...], b_ref[...],
                            preferred_element_type=jnp.float32)

    @pl.when(pl.program_id(2) == pl.num_programs(2) - 1)
    def _():
        o_ref[...] = acc_ref[...].astype(o_ref.dtype)


def _gcn_propagate_kernel(adj_ref, sup_k_ref, sup_i_ref, inv_deg_ref, b_ref,
                          out_ref, acc_ref, *, apply_relu):
    """out = inv_deg * (adj @ support + support) + b, optional ReLU.

    Grid = (N/tm, H/tn, N/tk); k is the reduction (innermost) axis.
    Epilogue (identity term, normalization, bias, ReLU) is done in f32
    (VPU-safe on v5e) and cast only at the final store.
    """
    k = pl.program_id(2)

    @pl.when(k == 0)
    def _():
        acc_ref[...] = jnp.zeros_like(acc_ref)

    acc_ref[...] += jnp.dot(adj_ref[...], sup_k_ref[...],
                            preferred_element_type=jnp.float32)

    @pl.when(k == pl.num_programs(2) - 1)
    def _():
        out = acc_ref[...] + sup_i_ref[...].astype(jnp.float32)   # (A + I) @ S
        out = out * inv_deg_ref[...] + b_ref[...]                 # D^-1(.) + b
        if apply_relu:
            out = jnp.maximum(out, 0.0)
        out_ref[...] = out.astype(out_ref.dtype)


def _log_softmax_kernel(x_ref, out_ref, *, valid_cols):
    """Row-block log_softmax; padded class columns are masked out."""
    x = x_ref[...]
    col = jax.lax.broadcasted_iota(jnp.int32, x.shape, 1)
    xm = jnp.where(col < valid_cols, x, jnp.full_like(x, -1e30))
    m = jnp.max(xm, axis=1, keepdims=True)
    z = xm - m
    lse = jnp.log(jnp.sum(jnp.exp(z), axis=1, keepdims=True))
    out_ref[...] = (z - lse).astype(out_ref.dtype)


# ---------------------------------------------------------------------------
# Pallas wrappers
# ---------------------------------------------------------------------------

def compute_inv_degree(adj_p):
    np_ = adj_p.shape[0]
    tm, tk = _pick_tile(np_), _pick_tile(np_)
    return pl.pallas_call(
        _inv_degree_kernel,
        out_shape=jax.ShapeDtypeStruct((np_, 1), jnp.float32),
        grid_spec=pltpu.PrefetchScalarGridSpec(
            num_scalar_prefetch=0,
            grid=(np_ // tm, np_ // tk),
            in_specs=[pl.BlockSpec((tm, tk), lambda i, k: (i, k))],
            out_specs=pl.BlockSpec((tm, 1), lambda i, k: (i, 0)),
            scratch_shapes=[pltpu.VMEM((tm, 1), jnp.float32)]),
        compiler_params=pltpu.CompilerParams(
            dimension_semantics=("parallel", "arbitrary"),
            vmem_limit_bytes=_VMEM_LIMIT),
        cost_estimate=pl.CostEstimate(
            flops=np_ * np_, transcendentals=0,
            bytes_accessed=np_ * np_ * _itemsize(adj_p.dtype) + np_ * 4),
    )(adj_p)


def matmul_tiled(a, b, out_dtype):
    m, k = a.shape
    _, n = b.shape
    tm, tn, tk = _pick_tile(m), _pick_tile(n), _pick_tile(k)
    bytes_acc = (m * k * _itemsize(a.dtype) + k * n * _itemsize(b.dtype)
                 + m * n * _itemsize(out_dtype))
    return pl.pallas_call(
        _matmul_kernel,
        out_shape=jax.ShapeDtypeStruct((m, n), out_dtype),
        grid_spec=pltpu.PrefetchScalarGridSpec(
            num_scalar_prefetch=0,
            grid=(m // tm, n // tn, k // tk),
            in_specs=[pl.BlockSpec((tm, tk), lambda i, j, kk: (i, kk)),
                      pl.BlockSpec((tk, tn), lambda i, j, kk: (kk, j))],
            out_specs=pl.BlockSpec((tm, tn), lambda i, j, kk: (i, j)),
            scratch_shapes=[pltpu.VMEM((tm, tn), jnp.float32)]),
        compiler_params=pltpu.CompilerParams(
            dimension_semantics=("parallel", "parallel", "arbitrary"),
            vmem_limit_bytes=_VMEM_LIMIT),
        cost_estimate=pl.CostEstimate(
            flops=2 * m * n * k, transcendentals=0, bytes_accessed=bytes_acc),
    )(a, b)


def gcn_propagate(adj_p, support, inv_deg, b_row, apply_relu, out_dtype):
    np_ = adj_p.shape[0]
    hp = support.shape[1]
    tm, tn, tk = _pick_tile(np_), _pick_tile(hp), _pick_tile(np_)
    kern = functools.partial(_gcn_propagate_kernel, apply_relu=apply_relu)
    bytes_acc = (np_ * np_ * _itemsize(adj_p.dtype)
                 + 2 * np_ * hp * _itemsize(support.dtype)
                 + np_ * hp * _itemsize(out_dtype) + np_ * 4 + hp * 4)
    return pl.pallas_call(
        kern,
        out_shape=jax.ShapeDtypeStruct((np_, hp), out_dtype),
        grid_spec=pltpu.PrefetchScalarGridSpec(
            num_scalar_prefetch=0,
            grid=(np_ // tm, hp // tn, np_ // tk),
            in_specs=[
                pl.BlockSpec((tm, tk), lambda i, j, k: (i, k)),   # adj
                pl.BlockSpec((tk, tn), lambda i, j, k: (k, j)),   # support (K)
                pl.BlockSpec((tm, tn), lambda i, j, k: (i, j)),   # support (+I)
                pl.BlockSpec((tm, 1), lambda i, j, k: (i, 0)),    # inv_deg
                pl.BlockSpec((1, tn), lambda i, j, k: (0, j)),    # bias row
            ],
            out_specs=pl.BlockSpec((tm, tn), lambda i, j, k: (i, j)),
            scratch_shapes=[pltpu.VMEM((tm, tn), jnp.float32)]),
        compiler_params=pltpu.CompilerParams(
            dimension_semantics=("parallel", "parallel", "arbitrary"),
            vmem_limit_bytes=_VMEM_LIMIT),
        cost_estimate=pl.CostEstimate(
            flops=2 * np_ * hp * np_ + 4 * np_ * hp, transcendentals=0,
            bytes_accessed=bytes_acc),
    )(adj_p, support, support, inv_deg, b_row)


def log_softmax_padded(x_p, valid_cols):
    np_, cp = x_p.shape
    tm = _pick_tile(np_)
    kern = functools.partial(_log_softmax_kernel, valid_cols=valid_cols)
    return pl.pallas_call(
        kern,
        out_shape=jax.ShapeDtypeStruct((np_, cp), jnp.float32),
        grid_spec=pltpu.PrefetchScalarGridSpec(
            num_scalar_prefetch=0,
            grid=(np_ // tm,),
            in_specs=[pl.BlockSpec((tm, cp), lambda i: (i, 0))],
            out_specs=pl.BlockSpec((tm, cp), lambda i: (i, 0))),
        compiler_params=pltpu.CompilerParams(
            dimension_semantics=("parallel",),
            vmem_limit_bytes=_VMEM_LIMIT),
        cost_estimate=pl.CostEstimate(
            flops=4 * np_ * cp, transcendentals=np_ * cp,
            bytes_accessed=2 * np_ * cp * 4),
    )(x_p)


# ---------------------------------------------------------------------------
# Parameter init (matches GraphConvolution.reset_parameters: normal_ init)
# ---------------------------------------------------------------------------

def init_gcn_params(key, nfeat_list):
    params = []
    for i in range(len(nfeat_list) - 1):
        key, kw, kb = jax.random.split(key, 3)
        w = jax.random.normal(kw, (nfeat_list[i], nfeat_list[i + 1]), jnp.float32)
        b = jax.random.normal(kb, (nfeat_list[i + 1],), jnp.float32)
        params.append((w, b))
    return params


# ---------------------------------------------------------------------------
# GCN forward (mirrors GCN.forward / GCN.loss)
# ---------------------------------------------------------------------------

def gcn_forward(params, x, labels, adj, obs_idx, dropout,
                training=False, key=None):
    nlay = len(params)
    n, f0 = x.shape
    np_ = _round_up(n, LANE)
    fp = _round_up(f0, LANE)

    # Raw adjacency, padded + cast to bf16 (0/1 exact); the normalized copy is
    # never materialized -- +I and D^-1 are folded into the layer epilogue.
    adj_p = _pad2(adj.astype(jnp.float32), np_, np_).astype(jnp.bfloat16)
    inv_deg = compute_inv_degree(adj_p)            # (Np, 1) f32, 1/(deg + 1)

    h = _pad2(x, np_, fp).astype(jnp.bfloat16)     # (Np, Fp) bf16 activations

    for i, (w, b) in enumerate(params):
        fin, fout = w.shape
        fin_p = h.shape[1]
        fout_p = _round_up(fout, LANE)
        w_p = _pad2(w, fin_p, fout_p).astype(jnp.bfloat16)
        b_p = jnp.pad(b, (0, fout_p - fout)).reshape(1, fout_p).astype(jnp.float32)
        last = (i == nlay - 1)

        # stage 1: small-K matmul, bf16 output feeds the big propagate matmul
        support = matmul_tiled(h, w_p, out_dtype=jnp.bfloat16)
        # stage 2: tiled adj @ support with fused +I, D^-1, bias, ReLU
        out = gcn_propagate(adj_p, support, inv_deg, b_p,
                            apply_relu=not last,
                            out_dtype=jnp.float32 if last else jnp.bfloat16)

        if not last and training:
            # TODO(synk): dropout kept as plain-JAX glue; could be fused into
            # the propagate epilogue with pltpu.prng_seed/prng_random_bits.
            key, sub = jax.random.split(key)
            keep = jax.random.bernoulli(sub, 1.0 - dropout, out.shape)
            out = jnp.where(keep, out.astype(jnp.float32) / (1.0 - dropout),
                            0.0).astype(jnp.bfloat16)
        h = out

    c = params[-1][0].shape[1]
    logp_p = log_softmax_padded(h, valid_cols=c)
    output = logp_p[:n, :c]

    # nll_loss(preds[obs_idx], labels[obs_idx]) with default mean reduction
    obs_logp = output[obs_idx]
    obs_lab = labels[obs_idx]
    nll_loss = -jnp.mean(obs_logp[jnp.arange(obs_idx.shape[0]), obs_lab])
    return output, nll_loss


# ---------------------------------------------------------------------------
# Demo
# ---------------------------------------------------------------------------

if __name__ == "__main__":
    key = jax.random.PRNGKey(0)

    # Small, module-consistent shapes: N=16 nodes, features 8 -> 32 -> 4 classes
    N = 16
    nfeat_list = [8, 32, 4]
    dropout = 0.5

    k_par, k_x, k_adj, k_lab = jax.random.split(key, 4)
    params = init_gcn_params(k_par, nfeat_list)

    x = jax.random.normal(k_x, (N, nfeat_list[0]), jnp.float32)

    # random symmetric binary adjacency (no self loops; forward adds I)
    a = (jax.random.uniform(k_adj, (N, N)) < 0.3).astype(jnp.float32)
    adj = jnp.clip(a + a.T, 0.0, 1.0)
    adj = adj * (1.0 - jnp.eye(N, dtype=jnp.float32))

    labels = jax.random.randint(k_lab, (N,), 0, nfeat_list[-1])
    obs_idx = jnp.arange(8)

    output, nll = gcn_forward(params, x, labels, adj, obs_idx, dropout,
                              training=False)
    jax.block_until_ready((output, nll))

    # plain-JAX f32 reference for a sanity check (bf16 matmul tolerance)
    deg = jnp.sum(adj, axis=1, keepdims=True) + 1.0
    a_norm = (adj + jnp.eye(N, dtype=jnp.float32)) / deg
    h_ref = x
    for li, (w, b) in enumerate(params):
        h_ref = a_norm @ (h_ref @ w) + b
        if li != len(params) - 1:
            h_ref = jnp.maximum(h_ref, 0.0)
    ref = jax.nn.log_softmax(h_ref, axis=1)

    assert output.shape == (N, nfeat_list[-1])
    assert bool(jnp.isfinite(nll))
    assert float(jnp.max(jnp.abs(output - ref))) < 1.0, "mismatch vs reference"
    print("KERNEL_OK")
</pallas_src>

<mosaic_0001>
module attributes {stable_mosaic.version = 11 : i64} {
  func.func @_inv_degree_kernel(%arg0: i32, %arg1: i32, %arg2: memref<128x128xbf16, #tpu.memory_space<vmem>>, %arg3: memref<128x1xf32, #tpu.memory_space<vmem>>, %arg4: memref<128x1xf32, #tpu.memory_space<vmem>>) attributes {dimension_semantics = [#tpu.dimension_semantics<parallel>, #tpu.dimension_semantics<arbitrary>], iteration_bounds = array<i64: 1, 1>, scalar_prefetch = 0 : i64, scratch_operands = 1 : i64, tpu.core_type = #tpu.core_type<tc>, window_params = [{transform_indices = @transform_0, window_bounds = array<i64: 128, 128>}, {transform_indices = @transform_1, window_bounds = array<i64: 128, 1>}]} {
    %c0_i32 = arith.constant 0 : i32
    %0 = arith.cmpi eq, %arg1, %c0_i32 : i32
    %1 = arith.extui %0 : i1 to i32
    %c0_i32_0 = arith.constant 0 : i32
    %2 = arith.cmpi ne, %1, %c0_i32_0 : i32
    scf.if %2 {
      %cst_8 = arith.constant 0.000000e+00 : f32
      %13 = vector.broadcast %cst_8 : f32 to vector<128x1xf32>
      %c0_9 = arith.constant 0 : index
      %c0_10 = arith.constant 0 : index
      %14 = vector.load %arg4[%c0_9, %c0_10] : memref<128x1xf32, #tpu.memory_space<vmem>>, vector<128x1xf32>
      tpu.vector_store %arg4[%c0_9, %c0_10], %13 {strides = array<i32>} : memref<128x1xf32, #tpu.memory_space<vmem>>, vector<128x1xf32>,
    } else {
    }
    %c0 = arith.constant 0 : index
    %c0_1 = arith.constant 0 : index
    %3 = vector.load %arg4[%c0, %c0_1] : memref<128x1xf32, #tpu.memory_space<vmem>>, vector<128x1xf32>
    %c0_2 = arith.constant 0 : index
    %c0_3 = arith.constant 0 : index
    %4 = vector.load %arg2[%c0_2, %c0_3] : memref<128x128xbf16, #tpu.memory_space<vmem>>, vector<128x128xbf16>
    %5 = arith.extf %4 : vector<128x128xbf16> to vector<128x128xf32>
    %cst = arith.constant dense<0.000000e+00> : vector<128xf32>
    %6 = vector.multi_reduction <add>, %5, %cst [1] : vector<128x128xf32> to vector<128xf32>
    %7 = vector.shape_cast %6 : vector<128xf32> to vector<128x1xf32>
    %8 = arith.addf %3, %7 : vector<128x1xf32>
    %c0_4 = arith.constant 0 : index
    %c0_5 = arith.constant 0 : index
    %9 = vector.load %arg4[%c0_4, %c0_5] : memref<128x1xf32, #tpu.memory_space<vmem>>, vector<128x1xf32>
    tpu.vector_store %arg4[%c0_4, %c0_5], %8 {strides = array<i32>} : memref<128x1xf32, #tpu.memory_space<vmem>>, vector<128x1xf32>,
    %c0_i32_6 = arith.constant 0 : i32
    %10 = arith.cmpi eq, %arg1, %c0_i32_6 : i32
    %11 = arith.extui %10 : i1 to i32
    %c0_i32_7 = arith.constant 0 : i32
    %12 = arith.cmpi ne, %11, %c0_i32_7 : i32
    scf.if %12 {
      %c0_8 = arith.constant 0 : index
      %c0_9 = arith.constant 0 : index
      %13 = vector.load %arg4[%c0_8, %c0_9] : memref<128x1xf32, #tpu.memory_space<vmem>>, vector<128x1xf32>
      %cst_10 = arith.constant 1.000000e+00 : f32
      %14 = vector.broadcast %cst_10 : f32 to vector<128x1xf32>
      %15 = arith.addf %13, %14 : vector<128x1xf32>
      %cst_11 = arith.constant 1.000000e+00 : f32
      %16 = vector.broadcast %cst_11 : f32 to vector<128x1xf32>
      %17 = arith.divf %16, %15 : vector<128x1xf32>
      %c0_12 = arith.constant 0 : index
      %c0_13 = arith.constant 0 : index
      %18 = vector.load %arg3[%c0_12, %c0_13] : memref<128x1xf32, #tpu.memory_space<vmem>>, vector<128x1xf32>
      tpu.vector_store %arg3[%c0_12, %c0_13], %17 {strides = array<i32>} : memref<128x1xf32, #tpu.memory_space<vmem>>, vector<128x1xf32>,
    } else {
    }
    return
  }
  func.func @transform_0(%arg0: i32, %arg1: i32) -> (i32, i32) {
    %c0_i32 = arith.constant 0 : i32
    return %arg0, %arg1 : i32, i32
  }
  func.func @transform_1(%arg0: i32, %arg1: i32) -> (i32, i32) {
    %c0_i32 = arith.constant 0 : i32
    %c0_i32_0 = arith.constant 0 : i32
    return %arg0, %c0_i32 : i32, i32
  }
}

</mosaic_0001>

<llo_original>
// kernel: tpu_custom_call.1
$region0: #{tpu_custom_call.1}
  #allocation0 [shape = 'u32[]', space=smem, size = 0x4, offset = 0x4, fixed_abs, tag = 'smem constant byte address 0x4 - core index']
  #allocation1 [shape = 'u32[144,128]{1,0:T(1,128)}', space=vmem, size = 0x12000, scoped, tag = 'internal scratch']
  #allocation2 [shape = 'f32[128,1]{1,0:T(8,128)}', space=vmem, size = 0x10000, scoped, tag = 'scratch operand']
  %s0 = inlined_call_operand.hbm [shape: bf16[128,128], index: 0, kind: input, shape index: {}]
  %s1 = inlined_call_operand.vmem [shape: f32[128,1], index: 1, kind: output, shape index: {}]
  %s2 = sld [smem:[#allocation0]]
  $region26: #{tpu_custom_call.1} parent=0
    _
  %s4 = ssub.s32 1, %s2
  %s5 = scalar_select 0, %s4, %s2
  $region1: #{tpu_custom_call.1} parent=0
    #allocation3 [shape = 'u8[32768]{0}', space=vmem, size = 0x8000, scoped, tag = 'input window, operand 0, single buffered']
    #allocation4 [shape = 's32[1]{0}', space=sflag, size = 0x4, scoped, tag = 'scoped memory for tpu_custom_call.1']
    %6 = vsyncpa [#allocation4], 0
    // Predicated region
    $region2: #{tpu_custom_call.1} parent=1 // pred_check
      _
    $region3: #{tpu_custom_call.1} parent=1 // pred_check_branch
      %8 = sbr.rel (0) target = $region5
    $region4: #{tpu_custom_call.1} parent=1 // pred_region
      %s10 = ssub.s32 1024, 1024
      %11 = vsyncadd [#allocation4], %s10
      %s12 = sshll.u32 [#allocation3], 4
      %s13 = int_to_ptr.vmem [resolvable:$true] %s12
      %18 = dma.hbm_to_vmem [thread:$0]  %s0, 1024, %s13, [#allocation4], 64, 64, 4
    $region5: #{tpu_custom_call.1} parent=1 // pred_fallthru
      _
    // Predicated region
    $region6: #{tpu_custom_call.1} parent=1 // pred_check
      _
    $region7: #{tpu_custom_call.1} parent=1 // pred_check_branch
      %20 = sbr.rel (0) target = $region9
    $region8: #{tpu_custom_call.1} parent=1 // pred_region
      %21 = dma.done [#allocation4], 1024
    $region9: #{tpu_custom_call.1} parent=1 // pred_fallthru
      _
    %p22 = scmp.eq.s32.totalorder 0, 0
    // Predicated region
    $region10: #{tpu_custom_call.1} parent=1 // pred_check
      %p23 = pneg %p22
    $region11: #{tpu_custom_call.1} parent=1 // pred_check_branch
      %25 = sbr.rel (%p23) target = $region13
    $region12: #{tpu_custom_call.1} parent=1 // pred_region
      %vm26 = vcmask 7168
      %27 = vst.msk [vmem:[#allocation2] sm:$0xff] %vm26, 0.0
      %28 = vst.msk [vmem:[#allocation2 + $0x8] sm:$0xff] %vm26, 0.0
      %29 = vst.msk [vmem:[#allocation2 + $0x10] sm:$0xff] %vm26, 0.0
      %30 = vst.msk [vmem:[#allocation2 + $0x18] sm:$0xff] %vm26, 0.0
      %31 = vst.msk [vmem:[#allocation2 + $0x20] sm:$0xff] %vm26, 0.0
      %32 = vst.msk [vmem:[#allocation2 + $0x28] sm:$0xff] %vm26, 0.0
      %33 = vst.msk [vmem:[#allocation2 + $0x30] sm:$0xff] %vm26, 0.0
      %34 = vst.msk [vmem:[#allocation2 + $0x38] sm:$0xff] %vm26, 0.0
      %35 = vst.msk [vmem:[#allocation2 + $0x40] sm:$0xff] %vm26, 0.0
      %36 = vst.msk [vmem:[#allocation2 + $0x48] sm:$0xff] %vm26, 0.0
      %37 = vst.msk [vmem:[#allocation2 + $0x50] sm:$0xff] %vm26, 0.0
      %38 = vst.msk [vmem:[#allocation2 + $0x58] sm:$0xff] %vm26, 0.0
      %39 = vst.msk [vmem:[#allocation2 + $0x60] sm:$0xff] %vm26, 0.0
      %40 = vst.msk [vmem:[#allocation2 + $0x68] sm:$0xff] %vm26, 0.0
      %41 = vst.msk [vmem:[#allocation2 + $0x70] sm:$0xff] %vm26, 0.0
      %42 = vst.msk [vmem:[#allocation2 + $0x78] sm:$0xff] %vm26, 0.0
    $region13: #{tpu_custom_call.1} parent=1 // pred_fallthru
      _
    %v43 = vld [vmem:[#allocation2] sm:$0xff]
    %v44 = vld [vmem:[#allocation2 + $0x8] sm:$0xff]
    %v45 = vld [vmem:[#allocation2 + $0x10] sm:$0xff]
    %v46 = vld [vmem:[#allocation2 + $0x18] sm:$0xff]
    %v47 = vld [vmem:[#allocation2 + $0x20] sm:$0xff]
    %v48 = vld [vmem:[#allocation2 + $0x28] sm:$0xff]
    %v49 = vld [vmem:[#allocation2 + $0x30] sm:$0xff]
    %v50 = vld [vmem:[#allocation2 + $0x38] sm:$0xff]
    %v51 = vld [vmem:[#allocation2 + $0x40] sm:$0xff]
    %v52 = vld [vmem:[#allocation2 + $0x48] sm:$0xff]
    %v53 = vld [vmem:[#allocation2 + $0x50] sm:$0xff]
    %v54 = vld [vmem:[#allocation2 + $0x58] sm:$0xff]
    %v55 = vld [vmem:[#allocation2 + $0x60] sm:$0xff]
    %v56 = vld [vmem:[#allocation2 + $0x68] sm:$0xff]
    %v57 = vld [vmem:[#allocation2 + $0x70] sm:$0xff]
    %v58 = vld [vmem:[#allocation2 + $0x78] sm:$0xff]
    %v59 = vld [vmem:[#allocation3] sm:$0xf]
    %v60 = vld [vmem:[#allocation3 + $0x4] sm:$0xf]
    %v61 = vld [vmem:[#allocation3 + $0x8] sm:$0xf]
    %v62 = vld [vmem:[#allocation3 + $0xc] sm:$0xf]
    %v63 = vld [vmem:[#allocation3 + $0x10] sm:$0xf]
    %v64 = vld [vmem:[#allocation3 + $0x14] sm:$0xf]
    %v65 = vld [vmem:[#allocation3 + $0x18] sm:$0xf]
    %v66 = vld [vmem:[#allocation3 + $0x1c] sm:$0xf]
    %v67 = vld [vmem:[#allocation3 + $0x20] sm:$0xf]
    %v68 = vld [vmem:[#allocation3 + $0x24] sm:$0xf]
    %v69 = vld [vmem:[#allocation3 + $0x28] sm:$0xf]
    %v70 = vld [vmem:[#allocation3 + $0x2c] sm:$0xf]
    %v71 = vld [vmem:[#allocation3 + $0x30] sm:$0xf]
    %v72 = vld [vmem:[#allocation3 + $0x34] sm:$0xf]
    %v73 = vld [vmem:[#allocation3 + $0x38] sm:$0xf]
    %v74 = vld [vmem:[#allocation3 + $0x3c] sm:$0xf]
    %v75 = vunpack.c.l.bf16 %v59
    %v76 = vunpack.c.l.bf16 %v60
    %v77 = vunpack.c.l.bf16 %v61
    %v78 = vunpack.c.l.bf16 %v62
    %v79 = vunpack.c.l.bf16 %v63
    %v80 = vunpack.c.l.bf16 %v64
    %v81 = vunpack.c.l.bf16 %v65
    %v82 = vunpack.c.l.bf16 %v66
    %v83 = vunpack.c.l.bf16 %v67
    %v84 = vunpack.c.l.bf16 %v68
    %v85 = vunpack.c.l.bf16 %v69
    %v86 = vunpack.c.l.bf16 %v70
    %v87 = vunpack.c.l.bf16 %v71
    %v88 = vunpack.c.l.bf16 %v72
    %v89 = vunpack.c.l.bf16 %v73
    %v90 = vunpack.c.l.bf16 %v74
    %91 = vadd.xlane.f32.xlu0 %v75
    %v92 = vpop.xlane.xlu0 %91
    %93 = vadd.xlane.f32.xlu0 %v76
    %v94 = vpop.xlane.xlu0 %93
    %95 = vadd.xlane.f32.xlu0 %v77
    %v96 = vpop.xlane.xlu0 %95
    %97 = vadd.xlane.f32.xlu0 %v78
    %v98 = vpop.xlane.xlu0 %97
    %99 = vadd.xlane.f32.xlu0 %v79
    %v100 = vpop.xlane.xlu0 %99
    %101 = vadd.xlane.f32.xlu0 %v80
    %v102 = vpop.xlane.xlu0 %101
    %103 = vadd.xlane.f32.xlu0 %v81
    %v104 = vpop.xlane.xlu0 %103
    %105 = vadd.xlane.f32.xlu0 %v82
    %v106 = vpop.xlane.xlu0 %105
    %107 = vadd.xlane.f32.xlu0 %v83
    %v108 = vpop.xlane.xlu0 %107
    %109 = vadd.xlane.f32.xlu0 %v84
    %v110 = vpop.xlane.xlu0 %109
    %111 = vadd.xlane.f32.xlu0 %v85
    %v112 = vpop.xlane.xlu0 %111
    %113 = vadd.xlane.f32.xlu0 %v86
    %v114 = vpop.xlane.xlu0 %113
    %115 = vadd.xlane.f32.xlu0 %v87
    %v116 = vpop.xlane.xlu0 %115
    %117 = vadd.xlane.f32.xlu0 %v88
    %v118 = vpop.xlane.xlu0 %117
    %119 = vadd.xlane.f32.xlu0 %v89
    %v120 = vpop.xlane.xlu0 %119
    %121 = vadd.xlane.f32.xlu0 %v90
    %v122 = vpop.xlane.xlu0 %121
    %v123 = vadd.f32 %v43, %v92
    %v124 = vadd.f32 %v44, %v94
    %v125 = vadd.f32 %v45, %v96
    %v126 = vadd.f32 %v46, %v98
    %v127 = vadd.f32 %v47, %v100
    %v128 = vadd.f32 %v48, %v102
    %v129 = vadd.f32 %v49, %v104
    %v130 = vadd.f32 %v50, %v106
    %v131 = vadd.f32 %v51, %v108
    %v132 = vadd.f32 %v52, %v110
    %v133 = vadd.f32 %v53, %v112
    %v134 = vadd.f32 %v54, %v114
    %v135 = vadd.f32 %v55, %v116
    %v136 = vadd.f32 %v56, %v118
    %v137 = vadd.f32 %v57, %v120
    %v138 = vadd.f32 %v58, %v122
    %vm139 = vcmask 7168
    %140 = vst.msk [vmem:[#allocation2] sm:$0xff] %vm139, %v123
    %141 = vst.msk [vmem:[#allocation2 + $0x8] sm:$0xff] %vm139, %v124
    %142 = vst.msk [vmem:[#allocation2 + $0x10] sm:$0xff] %vm139, %v125
    %143 = vst.msk [vmem:[#allocation2 + $0x18] sm:$0xff] %vm139, %v126
    %144 = vst.msk [vmem:[#allocation2 + $0x20] sm:$0xff] %vm139, %v127
    %145 = vst.msk [vmem:[#allocation2 + $0x28] sm:$0xff] %vm139, %v128
    %146 = vst.msk [vmem:[#allocation2 + $0x30] sm:$0xff] %vm139, %v129
    %147 = vst.msk [vmem:[#allocation2 + $0x38] sm:$0xff] %vm139, %v130
    %148 = vst.msk [vmem:[#allocation2 + $0x40] sm:$0xff] %vm139, %v131
    %149 = vst.msk [vmem:[#allocation2 + $0x48] sm:$0xff] %vm139, %v132
    %150 = vst.msk [vmem:[#allocation2 + $0x50] sm:$0xff] %vm139, %v133
    %151 = vst.msk [vmem:[#allocation2 + $0x58] sm:$0xff] %vm139, %v134
    %152 = vst.msk [vmem:[#allocation2 + $0x60] sm:$0xff] %vm139, %v135
    %153 = vst.msk [vmem:[#allocation2 + $0x68] sm:$0xff] %vm139, %v136
    %154 = vst.msk [vmem:[#allocation2 + $0x70] sm:$0xff] %vm139, %v137
    %155 = vst.msk [vmem:[#allocation2 + $0x78] sm:$0xff] %vm139, %v138
    // Predicated region
    $region14: #{tpu_custom_call.1} parent=1 // pred_check
      %p156 = pneg %p22
    $region15: #{tpu_custom_call.1} parent=1 // pred_check_branch
      %158 = sbr.rel (%p156) target = $region17
    $region16: #{tpu_custom_call.1} parent=1 // pred_region
      %v159 = vld [vmem:[#allocation2] sm:$0xff]
      %v160 = vld [vmem:[#allocation2 + $0x8] sm:$0xff]
      %v161 = vld [vmem:[#allocation2 + $0x10] sm:$0xff]
      %v162 = vld [vmem:[#allocation2 + $0x18] sm:$0xff]
      %v163 = vld [vmem:[#allocation2 + $0x20] sm:$0xff]
      %v164 = vld [vmem:[#allocation2 + $0x28] sm:$0xff]
      %v165 = vld [vmem:[#allocation2 + $0x30] sm:$0xff]
      %v166 = vld [vmem:[#allocation2 + $0x38] sm:$0xff]
      %v167 = vld [vmem:[#allocation2 + $0x40] sm:$0xff]
      %v168 = vld [vmem:[#allocation2 + $0x48] sm:$0xff]
      %v169 = vld [vmem:[#allocation2 + $0x50] sm:$0xff]
      %v170 = vld [vmem:[#allocation2 + $0x58] sm:$0xff]
      %v171 = vld [vmem:[#allocation2 + $0x60] sm:$0xff]
      %v172 = vld [vmem:[#allocation2 + $0x68] sm:$0xff]
      %v173 = vld [vmem:[#allocation2 + $0x70] sm:$0xff]
      %v174 = vld [vmem:[#allocation2 + $0x78] sm:$0xff]
      %v175 = vadd.f32 %v159, 1.0
      %v176 = vadd.f32 %v160, 1.0
      %v177 = vadd.f32 %v161, 1.0
      %v178 = vadd.f32 %v162, 1.0
      %v179 = vadd.f32 %v163, 1.0
      %v180 = vadd.f32 %v164, 1.0
      %v181 = vadd.f32 %v165, 1.0
      %v182 = vadd.f32 %v166, 1.0
      %v183 = vadd.f32 %v167, 1.0
      %v184 = vadd.f32 %v168, 1.0
      %v185 = vadd.f32 %v169, 1.0
      %v186 = vadd.f32 %v170, 1.0
      %v187 = vadd.f32 %v171, 1.0
      %v188 = vadd.f32 %v172, 1.0
      %v189 = vadd.f32 %v173, 1.0
      %v190 = vadd.f32 %v174, 1.0
      %v191 = vrcp.pop %v175
      %v192 = vmul.f32 1.0, %v191
      %v193 = vrcp.pop %v176
      %v194 = vmul.f32 1.0, %v193
      %v195 = vrcp.pop %v177
      %v196 = vmul.f32 1.0, %v195
      %v197 = vrcp.pop %v178
      %v198 = vmul.f32 1.0, %v197
      %v199 = vrcp.pop %v179
      %v200 = vmul.f32 1.0, %v199
      %v201 = vrcp.pop %v180
      %v202 = vmul.f32 1.0, %v201
      %v203 = vrcp.pop %v181
      %v204 = vmul.f32 1.0, %v203
      %v205 = vrcp.pop %v182
      %v206 = vmul.f32 1.0, %v205
      %v207 = vrcp.pop %v183
      %v208 = vmul.f32 1.0, %v207
      %v209 = vrcp.pop %v184
      %v210 = vmul.f32 1.0, %v209
      %v211 = vrcp.pop %v185
      %v212 = vmul.f32 1.0, %v211
      %v213 = vrcp.pop %v186
      %v214 = vmul.f32 1.0, %v213
      %v215 = vrcp.pop %v187
      %v216 = vmul.f32 1.0, %v215
      %v217 = vrcp.pop %v188
      %v218 = vmul.f32 1.0, %v217
      %v219 = vrcp.pop %v189
      %v220 = vmul.f32 1.0, %v219
      %v221 = vrcp.pop %v190
      %v222 = vmul.f32 1.0, %v221
      %223 = vst.msk [vmem:[%s1] sm:$0xff] %vm139, %v192
      %224 = vst.msk [vmem:[%s1 + $0x8] sm:$0xff] %vm139, %v194
      %225 = vst.msk [vmem:[%s1 + $0x10] sm:$0xff] %vm139, %v196
      %226 = vst.msk [vmem:[%s1 + $0x18] sm:$0xff] %vm139, %v198
      %227 = vst.msk [vmem:[%s1 + $0x20] sm:$0xff] %vm139, %v200
      %228 = vst.msk [vmem:[%s1 + $0x28] sm:$0xff] %vm139, %v202
      %229 = vst.msk [vmem:[%s1 + $0x30] sm:$0xff] %vm139, %v204
      %230 = vst.msk [vmem:[%s1 + $0x38] sm:$0xff] %vm139, %v206
      %231 = vst.msk [vmem:[%s1 + $0x40] sm:$0xff] %vm139, %v208
      %232 = vst.msk [vmem:[%s1 + $0x48] sm:$0xff] %vm139, %v210
      %233 = vst.msk [vmem:[%s1 + $0x50] sm:$0xff] %vm139, %v212
      %234 = vst.msk [vmem:[%s1 + $0x58] sm:$0xff] %vm139, %v214
      %235 = vst.msk [vmem:[%s1 + $0x60] sm:$0xff] %vm139, %v216
      %236 = vst.msk [vmem:[%s1 + $0x68] sm:$0xff] %vm139, %v218
      %237 = vst.msk [vmem:[%s1 + $0x70] sm:$0xff] %vm139, %v220
      %238 = vst.msk [vmem:[%s1 + $0x78] sm:$0xff] %vm139, %v222
    $region17: #{tpu_custom_call.1} parent=1 // pred_fallthru
      _
    // Predicated region
    $region18: #{tpu_custom_call.1} parent=1 // pred_check
      _
    $region19: #{tpu_custom_call.1} parent=1 // pred_check_branch
      %240 = sbr.rel (0) target = $region21
    $region20: #{tpu_custom_call.1} parent=1 // pred_region
      _
    $region21: #{tpu_custom_call.1} parent=1 // pred_fallthru
      _
    // Predicated region
    $region22: #{tpu_custom_call.1} parent=1 // pred_check
      _
    $region23: #{tpu_custom_call.1} parent=1 // pred_check_branch
      %242 = sbr.rel (0) target = $region25
    $region24: #{tpu_custom_call.1} parent=1 // pred_region
      _
    $region25: #{tpu_custom_call.1} parent=1 // pred_fallthru
      _
    %243 = vsyncpa [#allocation4], 1

</llo_original>
